<compile_context>
chip_gen: v6e
topology: v6e:2x2x1
jax: 0.10.0
libtpu: 0.0.40
codegen_flags: <defaults>
</compile_context>

<pallas_src>
import math

import jax
import jax.numpy as jnp
from jax import lax
from jax.experimental import pallas as pl
from jax.experimental.pallas import tpu as pltpu


# ----------------------------------------------------------------------------
# device sniffing helpers (generation-aware tiling / dtype choices)
# ----------------------------------------------------------------------------
def _device_kind():
    try:
        return jax.devices()[0].device_kind.lower()
    except Exception:
        return ""


def _is_v6_plus():
    kind = _device_kind()
    return ("v6" in kind) or ("v7" in kind)


def _vmem_cap_bytes():
    # v7x has 64 MiB VMEM per TC -> stay <= ~48 MiB; older gens can go higher.
    return (48 << 20) if ("v7" in _device_kind()) else (100 << 20)


# ----------------------------------------------------------------------------
# 1) Residual:  y = x + fn(x)   (fn fused into the kernel body)
# ----------------------------------------------------------------------------
def _residual_kernel(fn, compute_dtype):
    def kernel(x_ref, o_ref):
        xc = x_ref[...].astype(compute_dtype)
        o_ref[...] = (xc + fn(xc)).astype(o_ref.dtype)
    return kernel


def residual(fn, x, *, tile_rows=512, lane_width=512,
             storage_dtype=None, compute_dtype=None):
    """Pallas Residual: y = x + fn(x), fn fused in-kernel.

    The data is flattened and retiled into a lane-dense (rows, lane_width)
    layout, so `fn` must be elementwise (e.g. GELU/ReLU/SiLU).
    # TODO(synk): row-wise fns (LayerNorm-style) need feature-axis-preserving
    # blocking instead of the flattened layout.
    """
    orig_shape = x.shape
    sdt = jnp.dtype(storage_dtype) if storage_dtype is not None else x.dtype
    if compute_dtype is None:
        if sdt == jnp.dtype(jnp.bfloat16):
            # bf16 VPU/EUP only on v6e/v7x; v5e computes in f32 (storage stays bf16).
            compute_dtype = jnp.bfloat16 if _is_v6_plus() else jnp.float32
        else:
            compute_dtype = sdt

    n = x.size
    W = lane_width                                   # multiple of 128 -> unmasked stores
    rows = pl.cdiv(n, W)
    n_pad = rows * W

    xf = x.reshape(-1).astype(sdt)
    if n_pad != n:
        xf = jnp.pad(xf, (0, n_pad - n))
    x2 = xf.reshape(rows, W)

    tr = min(tile_rows, rows)
    if tr != rows:
        tr = max(8, (tr // 8) * 8)                   # keep sublane-aligned blocks
    grid = (pl.cdiv(rows, tr),)

    blk_bytes = tr * W * jnp.dtype(sdt).itemsize
    vmem_limit = int(min(_vmem_cap_bytes(), max(16 << 20, 8 * blk_bytes)))

    out2 = pl.pallas_call(
        _residual_kernel(fn, compute_dtype),
        out_shape=jax.ShapeDtypeStruct((rows, W), sdt),
        grid=grid,
        in_specs=[pl.BlockSpec((tr, W), lambda i: (i, 0))],
        out_specs=pl.BlockSpec((tr, W), lambda i: (i, 0)),
        compiler_params=pltpu.CompilerParams(
            dimension_semantics=("parallel",),       # feeds both TCs on v7x when grid >= 2
            vmem_limit_bytes=vmem_limit),
    )(x2)

    return out2.reshape(-1)[:n].reshape(orig_shape)


# ----------------------------------------------------------------------------
# 2) NodeTaskHead (grouped heads, padded n, bf16 delta, out_ref accumulation)
# ----------------------------------------------------------------------------
def _make_node_head_kernel(compute_dtype):
    cdt = compute_dtype

    def kernel(x_ref, bias_ref, delta_ref,
               wq_ref, wk_ref, wv_ref,
               bq_ref, bk_ref, bv_ref,
               wf_ref, bf_ref, out_ref):
        # grid = (batch, head_group); group axis is the reduction ("arbitrary").
        g = pl.program_id(1)
        G = bias_ref.shape[1]
        ghd = wq_ref.shape[-1]
        hd = ghd // G
        n_pad = out_ref.shape[-1]

        @pl.when(g == 0)
        def _():
            # init the resident output block with the force-proj bias
            out_ref[0] = jnp.broadcast_to(bf_ref[...], (3, n_pad))

        x = x_ref[0]                                                    # (n, E) bf16

        # Grouped projections: lane width G*hd (scaling already folded into wq/bq).
        q = jnp.dot(x, wq_ref[0], preferred_element_type=jnp.float32) + bq_ref[0]
        k = jnp.dot(x, wk_ref[0], preferred_element_type=jnp.float32) + bk_ref[0]
        v = jnp.dot(x, wv_ref[0], preferred_element_type=jnp.float32) + bv_ref[0]
        q = q.astype(jnp.bfloat16)
        k = k.astype(jnp.bfloat16)
        v = v.astype(jnp.bfloat16)
        wf = wf_ref[0]                                                  # (3, G*hd) bf16

        for h in range(G):                                              # static unroll
            lo, hi = h * hd, (h + 1) * hd
            qh, kh, vh = q[:, lo:hi], k[:, lo:hi], v[:, lo:hi]

            # attention logits for this head (bf16 MXU, f32 accumulation)
            s = lax.dot_general(qh, kh, (((1,), (1,)), ((), ())),
                                preferred_element_type=jnp.float32)     # (n, n)
            s = s + bias_ref[0, h].astype(jnp.float32)

            # softmax (dropout = eval-mode identity); exp in cdt, accum in f32
            m = jnp.max(s, axis=-1, keepdims=True)
            e = jnp.exp((s - m).astype(cdt))                            # (n, n) cdt
            denom = jnp.sum(e, axis=-1, keepdims=True, dtype=jnp.float32)
            inv = pl.reciprocal(denom, approx=True)[:, 0]               # (n,) f32 (EUP)

            # vwT[c, j] = wf_h[c, :] . v_h[j, :]   (3, n)
            vwT = lax.dot_general(wf[:, lo:hi], vh, (((1,), (1,)), ((), ())),
                                  preferred_element_type=jnp.float32).astype(cdt)

            for c in range(3):
                # one delta plane at a time (keeps live values at n^2, not 3n^2)
                wc = e * delta_ref[0, c]                                # (n, n) cdt
                row = jnp.sum(wc * vwT[c][None, :], axis=-1,
                              dtype=jnp.float32)                        # VPU mul + lane reduce
                out_ref[0, c] += row * inv                              # fold 1/denom here

    return kernel


def _prep_params(params, embed_dim, num_heads, heads_per_group):
    """Fold scaling, split weights per head-group, cast MXU operands to bf16."""
    G = heads_per_group
    n_groups = num_heads // G
    hd = embed_dim // num_heads
    ghd = G * hd
    scaling = hd ** (-0.5)

    def split_w(w):                                  # (E, E) -> (n_groups, E, G*hd)
        return jnp.transpose(w.reshape(embed_dim, n_groups, ghd), (1, 0, 2))

    def split_b(b):                                  # (1, E) -> (n_groups, 1, G*hd)
        return jnp.transpose(b.reshape(1, n_groups, ghd), (1, 0, 2))

    return dict(
        wq=split_w(params["wq"] * scaling).astype(jnp.bfloat16),
        wk=split_w(params["wk"]).astype(jnp.bfloat16),
        wv=split_w(params["wv"]).astype(jnp.bfloat16),
        bq=split_b(params["bq"] * scaling).astype(jnp.float32),
        bk=split_b(params["bk"]).astype(jnp.float32),
        bv=split_b(params["bv"]).astype(jnp.float32),
        wf=jnp.transpose(params["wf"].reshape(3, n_groups, ghd), (1, 0, 2)).astype(jnp.bfloat16),
        bf=params["bf"].reshape(3, 1).astype(jnp.float32),
    )


def node_task_head(params, query, attn_bias, delta_pos, *, embed_dim, num_heads,
                   exp_in_bf16=None):
    bsz, n_node, _ = query.shape
    hd = embed_dim // num_heads

    v6_plus = _is_v6_plus()
    if exp_in_bf16 is None:
        exp_in_bf16 = v6_plus            # bf16 VPU/EUP only on v6e/v7x
    cdt = jnp.bfloat16 if exp_in_bf16 else jnp.float32

    # Head grouping: make the QKV projection output lane width >= 128 (256 on v6e/v7x).
    target_lanes = 256 if v6_plus else 128
    G = min(num_heads, max(1, target_lanes // hd))
    while num_heads % G:
        G -= 1
    n_groups = num_heads // G
    ghd = G * hd

    # Pad n to a multiple of 128 -> lane-dense n^2 intermediates and output.
    n_pad = 128 * pl.cdiv(max(n_node, 1), 128)
    pad = n_pad - n_node

    p = _prep_params(params, embed_dim, num_heads, G)

    q_p = jnp.pad(query, ((0, 0), (0, pad), (0, 0))).astype(jnp.bfloat16)
    bias_f = jnp.pad(attn_bias.astype(jnp.float32),
                     ((0, 0), (0, 0), (0, pad), (0, pad)))
    col_mask = (jnp.arange(n_pad) >= n_node)[None, None, None, :]
    bias_p = jnp.where(col_mask, -1e9, bias_f).astype(jnp.bfloat16)      # masked softmax
    delta_p = jnp.pad(jnp.transpose(delta_pos, (0, 3, 1, 2)),
                      ((0, 0), (0, 0), (0, pad), (0, pad))).astype(jnp.bfloat16)

    in_specs = [
        pl.BlockSpec((1, n_pad, embed_dim), lambda b, g: (b, 0, 0)),       # query
        # TODO(synk): add pipeline_mode=pl.Buffered(3) here if profiling shows
        # exposed DMA on the per-group bias fetch.
        pl.BlockSpec((1, G, n_pad, n_pad), lambda b, g: (b, g, 0, 0)),     # bias (G heads)
        pl.BlockSpec((1, 3, n_pad, n_pad), lambda b, g: (b, 0, 0, 0)),     # delta (bf16)
        pl.BlockSpec((1, embed_dim, ghd), lambda b, g: (g, 0, 0)),         # wq group
        pl.BlockSpec((1, embed_dim, ghd), lambda b, g: (g, 0, 0)),         # wk group
        pl.BlockSpec((1, embed_dim, ghd), lambda b, g: (g, 0, 0)),         # wv group
        pl.BlockSpec((1, 1, ghd), lambda b, g: (g, 0, 0)),                 # bq group
        pl.BlockSpec((1, 1, ghd), lambda b, g: (g, 0, 0)),                 # bk group
        pl.BlockSpec((1, 1, ghd), lambda b, g: (g, 0, 0)),                 # bv group
        pl.BlockSpec((1, 3, ghd), lambda b, g: (g, 0, 0)),                 # wf group
        pl.BlockSpec((3, 1), lambda b, g: (0, 0)),                         # bf
    ]
    out_specs = pl.BlockSpec((1, 3, n_pad), lambda b, g: (b, 0, 0))        # resident across g

    # Derive the VMEM limit from the actual blocks (double-buffered inputs +
    # f32 intermediates + headroom), capped per generation (v7x <= ~48 MiB).
    blk_in = (n_pad * embed_dim * 2 + G * n_pad * n_pad * 2 + 3 * n_pad * n_pad * 2
              + 3 * embed_dim * ghd * 2 + 3 * ghd * 6 + 3 * ghd * 2 + 12)
    interm = 3 * n_pad * ghd * 4 + 6 * n_pad * n_pad * 4
    vmem_limit = int(min(_vmem_cap_bytes(),
                         max(16 << 20, 2 * blk_in + interm + 3 * n_pad * 4 + (4 << 20))))

    cur_force = pl.pallas_call(
        _make_node_head_kernel(cdt),
        out_shape=jax.ShapeDtypeStruct((bsz, 3, n_pad), jnp.float32),
        grid=(bsz, n_groups),
        in_specs=in_specs,
        out_specs=out_specs,
        compiler_params=pltpu.CompilerParams(
            dimension_semantics=("parallel", "arbitrary"),
            vmem_limit_bytes=vmem_limit),
    )(q_p, bias_p, delta_p,
      p["wq"], p["wk"], p["wv"],
      p["bq"], p["bk"], p["bv"],
      p["wf"], p["bf"])

    cur_force = cur_force[:, :, :n_node]
    # Tiny K=3 Gram product stays outside the kernel.
    return jnp.einsum("bci,bcj->bij", cur_force, cur_force)


def reference(params, query, attn_bias, delta_pos, *, embed_dim, num_heads):
    """Pure-JAX reference matching the PyTorch forward (eval mode)."""
    bsz, n, _ = query.shape
    hd = embed_dim // num_heads
    scaling = hd ** (-0.5)

    def lin(x, w, b):
        return x @ w + b

    q = lin(query, params["wq"], params["bq"]).reshape(bsz, n, num_heads, hd)
    q = jnp.transpose(q, (0, 2, 1, 3)) * scaling
    k = lin(query, params["wk"], params["bk"]).reshape(bsz, n, num_heads, hd)
    k = jnp.transpose(k, (0, 2, 1, 3))
    v = lin(query, params["wv"], params["bv"]).reshape(bsz, n, num_heads, hd)
    v = jnp.transpose(v, (0, 2, 1, 3))

    attn = jnp.einsum("bhid,bhjd->bhij", q, k)
    probs = jax.nn.softmax(attn + attn_bias, axis=-1)
    rot = probs[..., None] * delta_pos[:, None]                   # (b,h,i,j,3)
    rot = jnp.transpose(rot, (0, 1, 4, 2, 3))                     # (b,h,3,i,j)
    x = jnp.einsum("bhcij,bhjd->bhcid", rot, v)                   # (b,h,3,i,d)
    x = jnp.transpose(x, (0, 3, 2, 1, 4)).reshape(bsz, n, 3, embed_dim)

    fs = [x[:, :, c, :] @ params["wf"][c] + params["bf"][0, c] for c in range(3)]
    cf = jnp.stack(fs, axis=-1)                                   # (b,n,3)
    return jnp.einsum("bic,bjc->bij", cf, cf)


def init_params(key, embed_dim):
    ks = jax.random.split(key, 8)
    bound = 1.0 / math.sqrt(embed_dim)
    u = lambda k, shape: jax.random.uniform(k, shape, jnp.float32, -bound, bound)
    return {
        "wq": u(ks[0], (embed_dim, embed_dim)),
        "wk": u(ks[1], (embed_dim, embed_dim)),
        "wv": u(ks[2], (embed_dim, embed_dim)),
        "bq": u(ks[3], (1, embed_dim)),
        "bk": u(ks[4], (1, embed_dim)),
        "bv": u(ks[5], (1, embed_dim)),
        "wf": u(ks[6], (3, embed_dim)),   # stacked force_proj{1,2,3}.weight
        "bf": u(ks[7], (1, 3)),           # stacked force_proj{1,2,3}.bias
    }


if __name__ == "__main__":
    key = jax.random.PRNGKey(0)
    kx, kp, kq, kb, kd = jax.random.split(key, 5)

    # ---- 1) Residual module:  y = x + fn(x) ------------------------------
    x = jax.random.normal(kx, (2, 8, 32), jnp.float32)
    fn = lambda t: jax.nn.gelu(t, approximate=True)

    res_out = jax.block_until_ready(residual(fn, x))              # f32 storage/compute
    res_ref = x + fn(x)
    assert res_out.shape == x.shape and res_out.dtype == x.dtype
    assert jnp.allclose(res_out, res_ref, atol=1e-3, rtol=1e-3), \
        f"residual(f32) max abs err {jnp.max(jnp.abs(res_out - res_ref))}"

    res_bf = jax.block_until_ready(residual(fn, x, storage_dtype=jnp.bfloat16))
    assert res_bf.dtype == jnp.bfloat16
    assert jnp.allclose(res_bf.astype(jnp.float32), res_ref, atol=5e-2, rtol=5e-2), \
        f"residual(bf16) max abs err {jnp.max(jnp.abs(res_bf.astype(jnp.float32) - res_ref))}"

    # ---- 2) NodeTaskHead kernel (grouped heads, padded n) ------------------
    bsz, n_node, embed_dim, num_heads = 2, 8, 32, 4
    params = init_params(kp, embed_dim)
    query = jax.random.normal(kq, (bsz, n_node, embed_dim), jnp.float32)
    attn_bias = jax.random.normal(kb, (bsz, num_heads, n_node, n_node), jnp.float32)
    delta_pos = jax.random.normal(kd, (bsz, n_node, n_node, 3), jnp.float32)

    out = jax.block_until_ready(
        node_task_head(params, query, attn_bias, delta_pos,
                       embed_dim=embed_dim, num_heads=num_heads))
    ref = reference(params, query, attn_bias, delta_pos,
                    embed_dim=embed_dim, num_heads=num_heads)
    assert out.shape == (bsz, n_node, n_node)
    # bf16 exp/prob*delta + approx reciprocal -> loose tolerance vs f32 reference
    assert jnp.allclose(out, ref, atol=3e-2, rtol=3e-2), \
        f"node_task_head max abs err {jnp.max(jnp.abs(out - ref))}"

    print("KERNEL_OK")
</pallas_src>

<mosaic_0001>
module attributes {stable_mosaic.version = 11 : i64} {
  func.func @kernel(%arg0: i32, %arg1: memref<1x512xf32, #tpu.memory_space<vmem>>, %arg2: memref<1x512xf32, #tpu.memory_space<vmem>>) attributes {dimension_semantics = [#tpu.dimension_semantics<parallel>], iteration_bounds = array<i64: 1>, scalar_prefetch = 0 : i64, scratch_operands = 0 : i64, tpu.core_type = #tpu.core_type<tc>, window_params = [{transform_indices = @transform_0, window_bounds = array<i64: 1, 512>}, {transform_indices = @transform_1, window_bounds = array<i64: 1, 512>}]} {
    %c0 = arith.constant 0 : index
    %c0_0 = arith.constant 0 : index
    %0 = vector.load %arg1[%c0, %c0_0] : memref<1x512xf32, #tpu.memory_space<vmem>>, vector<1x512xf32>
    %1 = arith.mulf %0, %0 : vector<1x512xf32>
    %2 = arith.mulf %0, %1 : vector<1x512xf32>
    %cst = arith.constant 4.471500e-02 : f32
    %3 = vector.broadcast %cst : f32 to vector<1x512xf32>
    %4 = arith.mulf %3, %2 : vector<1x512xf32>
    %5 = arith.addf %0, %4 : vector<1x512xf32>
    %cst_1 = arith.constant 0.797884583 : f32
    %6 = vector.broadcast %cst_1 : f32 to vector<1x512xf32>
    %7 = arith.mulf %6, %5 : vector<1x512xf32>
    %8 = math.tanh %7 : vector<1x512xf32>
    %cst_2 = arith.constant 1.000000e+00 : f32
    %9 = vector.broadcast %cst_2 : f32 to vector<1x512xf32>
    %10 = arith.addf %9, %8 : vector<1x512xf32>
    %cst_3 = arith.constant 5.000000e-01 : f32
    %11 = vector.broadcast %cst_3 : f32 to vector<1x512xf32>
    %12 = arith.mulf %11, %10 : vector<1x512xf32>
    %13 = arith.mulf %0, %12 : vector<1x512xf32>
    %14 = arith.addf %0, %13 : vector<1x512xf32>
    %c0_4 = arith.constant 0 : index
    %c0_5 = arith.constant 0 : index
    %15 = vector.load %arg2[%c0_4, %c0_5] : memref<1x512xf32, #tpu.memory_space<vmem>>, vector<1x512xf32>
    tpu.vector_store %arg2[%c0_4, %c0_5], %14 {strides = array<i32>} : memref<1x512xf32, #tpu.memory_space<vmem>>, vector<1x512xf32>,
    return
  }
  func.func @transform_0(%arg0: i32) -> (i32, i32) {
    %c0_i32 = arith.constant 0 : i32
    %c0_i32_0 = arith.constant 0 : i32
    return %arg0, %c0_i32 : i32, i32
  }
  func.func @transform_1(%arg0: i32) -> (i32, i32) {
    %c0_i32 = arith.constant 0 : i32
    %c0_i32_0 = arith.constant 0 : i32
    return %arg0, %c0_i32 : i32, i32
  }
}

</mosaic_0001>

<llo_original>
// kernel: tpu_custom_call.1
$region0: #{tpu_custom_call.1}
  #allocation0 [shape = 'u32[]', space=smem, size = 0x4, offset = 0x4, fixed_abs, tag = 'smem constant byte address 0x4 - core index']
  #allocation1 [shape = 'u32[144,128]{1,0:T(1,128)}', space=vmem, size = 0x12000, scoped, tag = 'internal scratch']
  %s0 = inlined_call_operand.hbm [shape: f32[1,512], index: 0, kind: input, shape index: {}]
  %s1 = inlined_call_operand.hbm [shape: f32[1,512], index: 1, kind: output, shape index: {}]
  %s2 = sld [smem:[#allocation0]]
  $region18: #{tpu_custom_call.1} parent=0
    _
  %s4 = ssub.s32 1, %s2
  %s5 = scalar_select 0, %s4, %s2
  $region1: #{tpu_custom_call.1} parent=0
    #allocation2 [shape = 'u8[2048]{0}', space=vmem, size = 0x800, scoped, tag = 'input window, operand 0, single buffered']
    #allocation3 [shape = 's32[1]{0}', space=sflag, size = 0x4, scoped, tag = 'scoped memory for tpu_custom_call.1']
    #allocation4 [shape = 's32[1]{0}', space=sflag, size = 0x4, scoped, tag = 'scoped memory for tpu_custom_call.1']
    #allocation5 [shape = 'u8[2048]{0}', space=vmem, size = 0x800, scoped, tag = 'output window, operand 0, single buffered']
    %6 = vsyncpa [#allocation3], 0
    %7 = vsyncpa [#allocation4], 0
    // Predicated region
    $region2: #{tpu_custom_call.1} parent=1 // pred_check
      _
    $region3: #{tpu_custom_call.1} parent=1 // pred_check_branch
      %9 = sbr.rel (0) target = $region5
    $region4: #{tpu_custom_call.1} parent=1 // pred_region
      %s11 = ssub.s32 64, 64
      %12 = vsyncadd [#allocation3], %s11
      %s14 = sshll.u32 [#allocation2], 4
      %s15 = int_to_ptr.vmem [resolvable:$true] %s14
      %17 = dma.hbm_to_vmem [thread:$0]  %s0, 64, %s15, [#allocation3]
    $region5: #{tpu_custom_call.1} parent=1 // pred_fallthru
      _
    // Predicated region
    $region6: #{tpu_custom_call.1} parent=1 // pred_check
      _
    $region7: #{tpu_custom_call.1} parent=1 // pred_check_branch
      %19 = sbr.rel (0) target = $region9
    $region8: #{tpu_custom_call.1} parent=1 // pred_region
      %20 = dma.done [#allocation3], 64
    $region9: #{tpu_custom_call.1} parent=1 // pred_fallthru
      _
    %v21 = vld [vmem:[#allocation2] sm:$0xf]
    %v22 = vmul.f32 %v21, %v21
    %v23 = vmul.f32 %v21, %v22
    %v24 = vmul.f32 %v23, 0.044715
    %v25 = vadd.f32 %v21, %v24
    %v26 = vmul.f32 %v25, 0.7978846
    %v27 = vtanh.pop %v26
    %v28 = vadd.f32 %v27, 1.0
    %v29 = vmul.f32 %v28, 0.5
    %v30 = vmul.f32 %v21, %v29
    %v31 = vadd.f32 %v21, %v30
    %v32 = vlaneseq
    %vm33 = vcmp.ge.s32.totalorder %v32, 0
    %vm34 = vcmp.lt.s32.totalorder %v32, 512
    %vm35 = vmand %vm33, %vm34
    %36 = vst.msk [vmem:[#allocation5] sm:$0xf] %vm35, %v31
    // Predicated region
    $region10: #{tpu_custom_call.1} parent=1 // pred_check
      _
    $region11: #{tpu_custom_call.1} parent=1 // pred_check_branch
      %38 = sbr.rel (0) target = $region13
    $region12: #{tpu_custom_call.1} parent=1 // pred_region
      %s40 = ssub.s32 64, 64
      %41 = vsyncadd [#allocation4], %s40
      %s43 = sshll.u32 [#allocation5], 4
      %s44 = int_to_ptr.vmem [resolvable:$true] %s43
      %46 = dma.vmem_to_hbm [thread:$0]  %s44, 64, %s1, [#allocation4]
    $region13: #{tpu_custom_call.1} parent=1 // pred_fallthru
      _
    // Predicated region
    $region14: #{tpu_custom_call.1} parent=1 // pred_check
      _
    $region15: #{tpu_custom_call.1} parent=1 // pred_check_branch
      %48 = sbr.rel (0) target = $region17
    $region16: #{tpu_custom_call.1} parent=1 // pred_region
      %49 = dma.done [#allocation4], 64
    $region17: #{tpu_custom_call.1} parent=1 // pred_fallthru
      _
    %50 = vsyncpa [#allocation3], 1
    %51 = vsyncpa [#allocation4], 1

</llo_original>
